<compile_context>
chip_gen: v5e
topology: v5e:2x2
jax: 0.10.0
libtpu: 0.0.40
codegen_flags: <defaults>
</compile_context>

<pallas_src>
import functools

import jax
import jax.numpy as jnp
from jax.experimental import pallas as pl
from jax.experimental.pallas import tpu as pltpu

NEG_SLOPE = 0.01  # torch.nn.functional.leaky_relu default


def _leaky_relu_kernel(x_ref, o_ref):
    x = x_ref[...]
    # For 0 < slope < 1: max(x, slope*x) == leaky_relu(x, slope).
    o_ref[...] = jnp.maximum(x, x * jnp.asarray(NEG_SLOPE, x.dtype))


def _choose_lanes(n: int) -> int:
    """Largest lane width (multiple of 128) dividing n, widest first."""
    for lanes in (2048, 1024, 512, 256, 128):
        if n % lanes == 0:
            return lanes
    raise ValueError("bulk size must be a multiple of 128")


@functools.lru_cache(maxsize=None)
def _chip_config():
    """Return (block_bytes, vmem_limit_bytes) tuned to the local TPU generation."""
    try:
        vmem_bytes = int(pltpu.get_tpu_info().vmem_capacity_bytes)
    except Exception:
        # Conservative fallback that fits every generation.
        return 4 * 1024 * 1024, 32 * 1024 * 1024
    if vmem_bytes <= 64 * 1024 * 1024:
        # v7x: 64 MiB physical VMEM, 2 TensorCores share it under a parallel
        # grid -> ~4 MiB blocks (16 MiB double-buffered in+out per core).
        return 4 * 1024 * 1024, 48 * 1024 * 1024
    # v5e / v6e: 128 MiB physical VMEM. 8 MiB blocks (32 MiB footprint) cut the
    # ~0.35 us/step pipeline-overhead tax to a few percent; raise the scoped
    # VMEM limit above the 16/32 MiB defaults so the compiler keeps the tiles.
    return 8 * 1024 * 1024, 64 * 1024 * 1024


def _leaky_relu_bulk(x_flat: jax.Array, *, donate: bool) -> jax.Array:
    """LeakyReLU on a flat, 128-divisible array via a tiled lane-dense sweep."""
    n = x_flat.size
    dtype = x_flat.dtype
    itemsize = jnp.dtype(dtype).itemsize
    block_bytes, vmem_limit = _chip_config()

    lanes = _choose_lanes(n)
    rows = n // lanes
    x2d = x_flat.reshape(rows, lanes)

    # Sub-32-bit dtypes pack along sublanes: align row tiles to the packed
    # sublane multiple so boundary tiles keep unmasked full-width stores.
    sublane_mult = max(8, 32 // itemsize)

    total_bytes = n * itemsize
    # v7x has 2 TensorCores; a grid of (1,) leaves one idle. Guarantee >=2
    # parallel steps once the input is big enough to be worth splitting.
    min_steps = 2 if total_bytes > 2 * 1024 * 1024 else 1

    rows_cap = pl.cdiv(rows, min_steps)
    rows_target = max(1, block_bytes // (lanes * itemsize))
    rows_target = min(rows_target, rows_cap)

    if rows_target >= rows and min_steps == 1:
        tile_rows = rows  # single full-extent block (small inputs)
    else:
        tile_rows = max(sublane_mult, (rows_target // sublane_mult) * sublane_mult)
        tile_rows = min(tile_rows, rows)
        if tile_rows < rows:
            # Prefer a tile that divides rows exactly (last block stays full /
            # unmasked) without shrinking below half the bandwidth target.
            lo = max(sublane_mult, (tile_rows // 2 // sublane_mult) * sublane_mult)
            for cand in range(tile_rows, lo - 1, -sublane_mult):
                if rows % cand == 0:
                    tile_rows = cand
                    break

    grid = (pl.cdiv(rows, tile_rows),)

    cost = pl.CostEstimate(
        flops=2 * n, transcendentals=0, bytes_accessed=2 * n * itemsize
    )

    out2d = pl.pallas_call(
        _leaky_relu_kernel,
        out_shape=jax.ShapeDtypeStruct((rows, lanes), dtype),
        grid_spec=pltpu.PrefetchScalarGridSpec(
            num_scalar_prefetch=0,
            grid=grid,
            in_specs=[pl.BlockSpec((tile_rows, lanes), lambda i: (i, 0))],
            out_specs=pl.BlockSpec((tile_rows, lanes), lambda i: (i, 0)),
        ),
        compiler_params=pltpu.CompilerParams(
            dimension_semantics=("parallel",),
            vmem_limit_bytes=vmem_limit,
        ),
        cost_estimate=cost,
        input_output_aliases=({0: 0} if donate else {}),
    )(x2d)
    return out2d.reshape(-1)


def leaky_relu(x: jax.Array, *, donate: bool = False) -> jax.Array:
    """Elementwise LeakyReLU (slope 0.01), matching nn.functional.leaky_relu(x)."""
    if not jnp.issubdtype(x.dtype, jnp.floating):
        raise TypeError(f"leaky_relu expects a floating dtype, got {x.dtype}")
    orig_shape = x.shape
    n = x.size
    if n == 0:
        return x

    n_rem = n % 128
    n_bulk = n - n_rem

    if n_rem == 0:
        return _leaky_relu_bulk(jnp.ravel(x), donate=donate).reshape(orig_shape)

    # Sizes not divisible by 128: run the aligned bulk through the kernel and
    # handle the <=127-element tail with plain jnp (no pad+slice HBM round-trip).
    x_flat = jnp.ravel(x)
    tail = x_flat[n_bulk:]
    tail_out = jnp.where(tail >= 0, tail, tail * jnp.asarray(NEG_SLOPE, x.dtype))
    if n_bulk == 0:
        return tail_out.reshape(orig_shape)
    bulk_out = _leaky_relu_bulk(x_flat[:n_bulk], donate=donate)
    # TODO(synk): a masked final block (pltpu.store mask / pl.BoundedSlice) would
    # avoid the concatenate's extra output materialization for ragged sizes.
    return jnp.concatenate([bulk_out, tail_out]).reshape(orig_shape)


if __name__ == "__main__":
    def ref(v):
        return jnp.where(v >= 0, v, 0.01 * v)

    # Small NCHW activation, consistent with the module's typical usage.
    x = jax.random.normal(jax.random.PRNGKey(0), (2, 4, 16, 16), dtype=jnp.float32)
    y = jax.block_until_ready(leaky_relu(x))
    assert y.shape == x.shape and y.dtype == x.dtype
    assert jnp.allclose(y, ref(x), atol=1e-6, rtol=1e-6)

    # Larger input: exercises the >=2-step parallel grid path (v7x dual-TC).
    x2 = jax.random.normal(jax.random.PRNGKey(1), (8, 32, 64, 64), dtype=jnp.float32)
    y2 = jax.block_until_ready(leaky_relu(x2))
    assert y2.shape == x2.shape and y2.dtype == x2.dtype
    assert jnp.allclose(y2, ref(x2), atol=1e-6, rtol=1e-6)

    # bf16 input: exercises the 16-row packed-sublane tile alignment.
    x3 = jax.random.normal(jax.random.PRNGKey(2), (4, 8, 32, 128), dtype=jnp.bfloat16)
    y3 = jax.block_until_ready(leaky_relu(x3))
    assert y3.shape == x3.shape and y3.dtype == jnp.bfloat16
    assert jnp.allclose(
        y3.astype(jnp.float32), ref(x3.astype(jnp.float32)), atol=1e-2, rtol=1e-2
    )

    # Size not divisible by 128: aligned bulk via the kernel, 71-element jnp tail.
    x4 = jax.random.normal(jax.random.PRNGKey(3), (5, 7, 13), dtype=jnp.float32)
    y4 = jax.block_until_ready(leaky_relu(x4))
    assert y4.shape == x4.shape and y4.dtype == x4.dtype
    assert jnp.allclose(y4, ref(x4), atol=1e-6, rtol=1e-6)

    print("KERNEL_OK")
</pallas_src>

<mosaic_0001>
module attributes {stable_mosaic.version = 11 : i64} {
  func.func @_leaky_relu_kernel(%arg0: i32, %arg1: memref<1x2048xf32, #tpu.memory_space<vmem>>, %arg2: memref<1x2048xf32, #tpu.memory_space<vmem>>) attributes {dimension_semantics = [#tpu.dimension_semantics<parallel>], iteration_bounds = array<i64: 1>, scalar_prefetch = 0 : i64, scratch_operands = 0 : i64, tpu.core_type = #tpu.core_type<tc>, window_params = [{transform_indices = @transform_0, window_bounds = array<i64: 1, 2048>}, {transform_indices = @transform_1, window_bounds = array<i64: 1, 2048>}]} {
    %c0 = arith.constant 0 : index
    %c0_0 = arith.constant 0 : index
    %0 = vector.load %arg1[%c0, %c0_0] : memref<1x2048xf32, #tpu.memory_space<vmem>>, vector<1x2048xf32>
    %cst = arith.constant 0.00999999977 : f32
    %1 = vector.broadcast %cst : f32 to vector<1x2048xf32>
    %2 = arith.mulf %0, %1 : vector<1x2048xf32>
    %3 = arith.maximumf %0, %2 : vector<1x2048xf32>
    %c0_1 = arith.constant 0 : index
    %c0_2 = arith.constant 0 : index
    %4 = vector.load %arg2[%c0_1, %c0_2] : memref<1x2048xf32, #tpu.memory_space<vmem>>, vector<1x2048xf32>
    tpu.vector_store %arg2[%c0_1, %c0_2], %3 {strides = array<i32>} : memref<1x2048xf32, #tpu.memory_space<vmem>>, vector<1x2048xf32>,
    return
  }
  func.func @transform_0(%arg0: i32) -> (i32, i32) {
    %c0_i32 = arith.constant 0 : i32
    %c0_i32_0 = arith.constant 0 : i32
    return %arg0, %c0_i32 : i32, i32
  }
  func.func @transform_1(%arg0: i32) -> (i32, i32) {
    %c0_i32 = arith.constant 0 : i32
    %c0_i32_0 = arith.constant 0 : i32
    return %arg0, %c0_i32 : i32, i32
  }
}

</mosaic_0001>

<llo_original>
// kernel: tpu_custom_call.1
$region0: #{tpu_custom_call.1}
  #allocation0 [shape = 'u32[]', space=smem, size = 0x4, offset = 0x4, fixed_abs, tag = 'smem constant byte address 0x4 - core index']
  #allocation1 [shape = 'u32[72,128]{1,0:T(1,128)}', space=vmem, size = 0x9000, scoped, tag = 'internal scratch']
  %s0 = inlined_call_operand.hbm [shape: f32[1,2048], index: 0, kind: input, shape index: {}]
  %s1 = inlined_call_operand.hbm [shape: f32[1,2048], index: 1, kind: output, shape index: {}]
  %s2 = sld [smem:[#allocation0]]
  $region18: #{tpu_custom_call.1} parent=0
    _
  %s4 = ssub.s32 1, %s2
  %s5 = scalar_select 0, %s4, %s2
  $region1: #{tpu_custom_call.1} parent=0
    #allocation2 [shape = 'u8[8192]{0}', space=vmem, size = 0x2000, scoped, tag = 'input window, operand 0, single buffered']
    #allocation3 [shape = 's32[1]{0}', space=sflag, size = 0x4, scoped, tag = 'scoped memory for tpu_custom_call.1']
    #allocation4 [shape = 's32[1]{0}', space=sflag, size = 0x4, scoped, tag = 'scoped memory for tpu_custom_call.1']
    #allocation5 [shape = 'u8[8192]{0}', space=vmem, size = 0x2000, scoped, tag = 'output window, operand 0, single buffered']
    %6 = vsyncpa [#allocation3], 0
    %7 = vsyncpa [#allocation4], 0
    // Predicated region
    $region2: #{tpu_custom_call.1} parent=1 // pred_check
      _
    $region3: #{tpu_custom_call.1} parent=1 // pred_check_branch
      %9 = sbr.rel (0) target = $region5
    $region4: #{tpu_custom_call.1} parent=1 // pred_region
      %11 = vsyncadd [#allocation3], 0
      %s13 = sshll.u32 %s0, 4
      %s14 = int_to_ptr.hbm [resolvable:$true] %s13
      %s15 = sshll.u32 [#allocation2], 4
      %s16 = int_to_ptr.vmem [resolvable:$true] %s15
      %18 = dma.hbm_to_vmem [thread:$0]  %s14, 256, %s16, [#allocation3]
    $region5: #{tpu_custom_call.1} parent=1 // pred_fallthru
      _
    // Predicated region
    $region6: #{tpu_custom_call.1} parent=1 // pred_check
      _
    $region7: #{tpu_custom_call.1} parent=1 // pred_check_branch
      %20 = sbr.rel (0) target = $region9
    $region8: #{tpu_custom_call.1} parent=1 // pred_region
      %22 = dma.done [#allocation3], 256
    $region9: #{tpu_custom_call.1} parent=1 // pred_fallthru
      _
    %v23 = vld [vmem:[#allocation2] sm:$0xff]
    %v24 = vld [vmem:[#allocation2 + $0x8] sm:$0xff]
    %v25 = vmul.f32 %v23, 0.01
    %v26 = vmul.f32 %v24, 0.01
    %v27 = vmax.f32 %v23, %v25
    %v28 = vmax.f32 %v24, %v26
    %29 = vst [vmem:[#allocation5] sm:$0xff] %v27
    %30 = vst [vmem:[#allocation5 + $0x8] sm:$0xff] %v28
    // Predicated region
    $region10: #{tpu_custom_call.1} parent=1 // pred_check
      _
    $region11: #{tpu_custom_call.1} parent=1 // pred_check_branch
      %32 = sbr.rel (0) target = $region13
    $region12: #{tpu_custom_call.1} parent=1 // pred_region
      %34 = vsyncadd [#allocation4], 0
      %s36 = sshll.u32 [#allocation5], 4
      %s37 = int_to_ptr.vmem [resolvable:$true] %s36
      %s38 = sshll.u32 %s1, 4
      %s39 = int_to_ptr.hbm [resolvable:$true] %s38
      %41 = dma.vmem_to_hbm [thread:$0]  %s37, 256, %s39, [#allocation4]
    $region13: #{tpu_custom_call.1} parent=1 // pred_fallthru
      _
    // Predicated region
    $region14: #{tpu_custom_call.1} parent=1 // pred_check
      _
    $region15: #{tpu_custom_call.1} parent=1 // pred_check_branch
      %43 = sbr.rel (0) target = $region17
    $region16: #{tpu_custom_call.1} parent=1 // pred_region
      %45 = dma.done [#allocation4], 256
    $region17: #{tpu_custom_call.1} parent=1 // pred_fallthru
      _
    %46 = vsyncpa [#allocation3], 1
    %47 = vsyncpa [#allocation4], 1

</llo_original>
